<compile_context>
chip_gen: v6e
topology: v6e:2x2x1
jax: 0.10.0
libtpu: 0.0.40
codegen_flags: <defaults>
</compile_context>

<pallas_src>
import jax
import jax.numpy as jnp
from jax.experimental import pallas as pl
from jax.experimental.pallas import tpu as pltpu

_LANE = 128
_SUBLANE = 8


def _cdiv(a, b):
    return (a + b - 1) // b


def _round_up(x, m):
    return _cdiv(x, m) * m


def _make_kernel(hw_rem, needs_mask):
    """Build the kernel; hw_rem / needs_mask are static (trace-time) values."""

    def kernel(pred_ref, tgt_ref, ratio_ref, err_acc, tgt_acc):
        # grid = (row tiles ["parallel"], HW tiles ["arbitrary" reduction])
        k = pl.program_id(1)
        last = pl.num_programs(1) - 1

        @pl.when(k == 0)
        def _init():
            err_acc[...] = jnp.zeros_like(err_acc)
            tgt_acc[...] = jnp.zeros_like(tgt_acc)

        def accumulate(valid_cols=None):
            p = pred_ref[...].astype(jnp.float32)      # (tile_n, tile_hw)
            t = tgt_ref[...].astype(jnp.float32)       # (tile_n, tile_hw)
            if valid_cols is not None:
                # Zero both contributions of out-of-range columns exactly.
                col = jax.lax.broadcasted_iota(jnp.int32, p.shape, 1)
                keep = col < valid_cols
                p = jnp.where(keep, p, 0.0)
                t = jnp.where(keep, t, 0.0)
            e = p - t
            err_acc[...] += jnp.sum(e * e, axis=-1, keepdims=True)  # (tile_n, 1)
            tgt_acc[...] += jnp.sum(t * t, axis=-1, keepdims=True)  # (tile_n, 1)

        if needs_mask:
            # Only the last HW tile is partial; full tiles take the unmasked path.
            @pl.when(k != last)
            def _full():
                accumulate()

            @pl.when(k == last)
            def _edge():
                accumulate(hw_rem)
        else:
            accumulate()

        @pl.when(k == last)
        def _finalize():
            # Fused: one sqrt of the ratio instead of two sqrts + a divide.
            ratio_ref[...] = jnp.sqrt(err_acc[...] / tgt_acc[...])

    return kernel


def _choose_tiles(N, HW, itemsize, block_budget_bytes):
    """Pick (tile_n, tile_hw) so one input block is ~block_budget_bytes."""
    # Sublane packing granularity: 8 rows for 32-bit dtypes, 16 for 16-bit.
    row_gran = max(_SUBLANE, _SUBLANE * 4 // itemsize)
    budget_elems = max(block_budget_bytes // itemsize, row_gran * _LANE)

    if budget_elems // HW >= row_gran:
        # Small/medium images: whole HW in one block (single reduction step);
        # grow the row tile to fill the budget.
        tile_hw = HW
        tile_n = (budget_elems // HW // row_gran) * row_gran
        if N >= 2 * row_gran:
            # Keep at least 2 row tiles so the "parallel" axis can feed both
            # v7x TensorCores (harmless no-op on single-TC v5e/v6e).
            tile_n = min(tile_n, _round_up(_cdiv(N, 2), row_gran))
        # Either a multiple of row_gran (< N) or exactly N (full dim): both
        # satisfy the (8, 128) block constraint.
        tile_n = min(tile_n, N)
    else:
        # Large images: tile the HW (reduction) axis as well.
        tile_n = min(row_gran, N)
        tile_hw = (budget_elems // max(tile_n, 1) // _LANE) * _LANE
        tile_hw = max(min(tile_hw, _round_up(HW, _LANE)), _LANE)
    return tile_n, tile_hw


def nl2norm(pred, target, *,
            block_budget_bytes=8 * 1024 * 1024,    # per-input VMEM block
            vmem_limit_bytes=48 * 1024 * 1024):     # fits v7x (64 MiB), ample on v5e/v6e
    """pred, target: (..., H, W) arrays (e.g. NCHW). Returns scalar f32.

    Rows whose target is identically zero produce inf/nan, matching the
    PyTorch reference (no epsilon).
    """
    assert pred.shape == target.shape and pred.ndim >= 2
    H, W = pred.shape[-2:]
    N = 1
    for d in pred.shape[:-2]:
        N *= d
    N = max(N, 1)
    HW = H * W

    # Free, contiguous reshape; NO padding (no extra HBM pass).
    p2 = pred.reshape(N, HW)
    t2 = target.reshape(N, HW)

    itemsize = jnp.dtype(p2.dtype).itemsize
    tile_n, tile_hw = _choose_tiles(N, HW, itemsize, block_budget_bytes)

    grid = (_cdiv(N, tile_n), _cdiv(HW, tile_hw))
    num_hw_tiles = grid[1]
    hw_rem = HW - (num_hw_tiles - 1) * tile_hw       # valid cols in last HW tile
    needs_mask = hw_rem != tile_hw

    kernel = _make_kernel(hw_rem, needs_mask)

    cost = pl.CostEstimate(
        flops=6 * N * HW,
        bytes_accessed=2 * N * HW * itemsize + 4 * N,
        transcendentals=N,
    )

    ratios = pl.pallas_call(
        kernel,
        out_shape=jax.ShapeDtypeStruct((N, 1), jnp.float32),
        grid_spec=pltpu.PrefetchScalarGridSpec(
            num_scalar_prefetch=0,
            grid=grid,
            in_specs=[
                pl.BlockSpec((tile_n, tile_hw), lambda i, k: (i, k)),
                pl.BlockSpec((tile_n, tile_hw), lambda i, k: (i, k)),
            ],
            out_specs=pl.BlockSpec((tile_n, 1), lambda i, k: (i, 0)),
            scratch_shapes=[
                pltpu.VMEM((tile_n, 1), jnp.float32),
                pltpu.VMEM((tile_n, 1), jnp.float32),
            ],
        ),
        compiler_params=pltpu.CompilerParams(
            dimension_semantics=("parallel", "arbitrary"),
            vmem_limit_bytes=vmem_limit_bytes,
        ),
        cost_estimate=cost,
    )(p2, t2)

    # Tiny final mean over the B*C per-row ratios in plain JAX (keeps the row
    # grid axis "parallel" and avoids a serial scalar accumulator).
    return jnp.mean(ratios)


def nl2norm_ref(pred, target):
    err = pred - target
    err_energy = jnp.sqrt(jnp.sum(err * err, axis=(-1, -2)))
    tgt_energy = jnp.sqrt(jnp.sum(target * target, axis=(-1, -2)))
    return jnp.mean(err_energy / tgt_energy)


if __name__ == "__main__":
    # NL2norm has no learnable parameters; only inputs are needed.
    key = jax.random.PRNGKey(0)
    k1, k2 = jax.random.split(key)
    B, C, H, W = 2, 4, 16, 16
    pred = jax.random.normal(k1, (B, C, H, W), dtype=jnp.float32)
    target = jax.random.normal(k2, (B, C, H, W), dtype=jnp.float32)

    out = jax.block_until_ready(nl2norm(pred, target))
    ref = jax.block_until_ready(nl2norm_ref(pred, target))
    assert jnp.allclose(out, ref, rtol=1e-4, atol=1e-5), (out, ref)

    # Extra check with non-tile-aligned N and HW (exercises in-kernel masking
    # and the partial row block) on a second, odd-shaped input.
    B2, C2, H2, W2 = 3, 5, 13, 11
    k3, k4 = jax.random.split(k2)
    pred2 = jax.random.normal(k3, (B2, C2, H2, W2), dtype=jnp.float32)
    target2 = jax.random.normal(k4, (B2, C2, H2, W2), dtype=jnp.float32)
    out2 = jax.block_until_ready(nl2norm(pred2, target2))
    ref2 = jax.block_until_ready(nl2norm_ref(pred2, target2))
    assert jnp.allclose(out2, ref2, rtol=1e-4, atol=1e-5), (out2, ref2)

    print("KERNEL_OK")
</pallas_src>

<mosaic_0001>
module attributes {stable_mosaic.version = 11 : i64} {
  func.func @kernel(%arg0: i32, %arg1: i32, %arg2: memref<8x256xf32, #tpu.memory_space<vmem>>, %arg3: memref<8x256xf32, #tpu.memory_space<vmem>>, %arg4: memref<8x1xf32, #tpu.memory_space<vmem>>, %arg5: memref<8x1xf32, #tpu.memory_space<vmem>>, %arg6: memref<8x1xf32, #tpu.memory_space<vmem>>) attributes {dimension_semantics = [#tpu.dimension_semantics<parallel>, #tpu.dimension_semantics<arbitrary>], iteration_bounds = array<i64: 1, 1>, scalar_prefetch = 0 : i64, scratch_operands = 2 : i64, tpu.core_type = #tpu.core_type<tc>, window_params = [{transform_indices = @transform_0, window_bounds = array<i64: 8, 256>}, {transform_indices = @transform_1, window_bounds = array<i64: 8, 256>}, {transform_indices = @transform_2, window_bounds = array<i64: 8, 1>}]} {
    %c0_i32 = arith.constant 0 : i32
    %0 = arith.cmpi eq, %arg1, %c0_i32 : i32
    %1 = arith.extui %0 : i1 to i32
    %c0_i32_0 = arith.constant 0 : i32
    %2 = arith.cmpi ne, %1, %c0_i32_0 : i32
    scf.if %2 {
      %cst_15 = arith.constant 0.000000e+00 : f32
      %21 = vector.broadcast %cst_15 : f32 to vector<8x1xf32>
      %c0_16 = arith.constant 0 : index
      %c0_17 = arith.constant 0 : index
      %22 = vector.load %arg5[%c0_16, %c0_17] : memref<8x1xf32, #tpu.memory_space<vmem>>, vector<8x1xf32>
      tpu.vector_store %arg5[%c0_16, %c0_17], %21 {strides = array<i32>} : memref<8x1xf32, #tpu.memory_space<vmem>>, vector<8x1xf32>,
      %cst_18 = arith.constant 0.000000e+00 : f32
      %23 = vector.broadcast %cst_18 : f32 to vector<8x1xf32>
      %c0_19 = arith.constant 0 : index
      %c0_20 = arith.constant 0 : index
      %24 = vector.load %arg6[%c0_19, %c0_20] : memref<8x1xf32, #tpu.memory_space<vmem>>, vector<8x1xf32>
      tpu.vector_store %arg6[%c0_19, %c0_20], %23 {strides = array<i32>} : memref<8x1xf32, #tpu.memory_space<vmem>>, vector<8x1xf32>,
    } else {
    }
    %c0 = arith.constant 0 : index
    %c0_1 = arith.constant 0 : index
    %3 = vector.load %arg2[%c0, %c0_1] : memref<8x256xf32, #tpu.memory_space<vmem>>, vector<8x256xf32>
    %c0_2 = arith.constant 0 : index
    %c0_3 = arith.constant 0 : index
    %4 = vector.load %arg3[%c0_2, %c0_3] : memref<8x256xf32, #tpu.memory_space<vmem>>, vector<8x256xf32>
    %5 = arith.subf %3, %4 : vector<8x256xf32>
    %c0_4 = arith.constant 0 : index
    %c0_5 = arith.constant 0 : index
    %6 = vector.load %arg5[%c0_4, %c0_5] : memref<8x1xf32, #tpu.memory_space<vmem>>, vector<8x1xf32>
    %7 = arith.mulf %5, %5 : vector<8x256xf32>
    %cst = arith.constant dense<0.000000e+00> : vector<8xf32>
    %8 = vector.multi_reduction <add>, %7, %cst [1] : vector<8x256xf32> to vector<8xf32>
    %9 = vector.shape_cast %8 : vector<8xf32> to vector<8x1xf32>
    %10 = arith.addf %6, %9 : vector<8x1xf32>
    %c0_6 = arith.constant 0 : index
    %c0_7 = arith.constant 0 : index
    %11 = vector.load %arg5[%c0_6, %c0_7] : memref<8x1xf32, #tpu.memory_space<vmem>>, vector<8x1xf32>
    tpu.vector_store %arg5[%c0_6, %c0_7], %10 {strides = array<i32>} : memref<8x1xf32, #tpu.memory_space<vmem>>, vector<8x1xf32>,
    %c0_8 = arith.constant 0 : index
    %c0_9 = arith.constant 0 : index
    %12 = vector.load %arg6[%c0_8, %c0_9] : memref<8x1xf32, #tpu.memory_space<vmem>>, vector<8x1xf32>
    %13 = arith.mulf %4, %4 : vector<8x256xf32>
    %cst_10 = arith.constant dense<0.000000e+00> : vector<8xf32>
    %14 = vector.multi_reduction <add>, %13, %cst_10 [1] : vector<8x256xf32> to vector<8xf32>
    %15 = vector.shape_cast %14 : vector<8xf32> to vector<8x1xf32>
    %16 = arith.addf %12, %15 : vector<8x1xf32>
    %c0_11 = arith.constant 0 : index
    %c0_12 = arith.constant 0 : index
    %17 = vector.load %arg6[%c0_11, %c0_12] : memref<8x1xf32, #tpu.memory_space<vmem>>, vector<8x1xf32>
    tpu.vector_store %arg6[%c0_11, %c0_12], %16 {strides = array<i32>} : memref<8x1xf32, #tpu.memory_space<vmem>>, vector<8x1xf32>,
    %c0_i32_13 = arith.constant 0 : i32
    %18 = arith.cmpi eq, %arg1, %c0_i32_13 : i32
    %19 = arith.extui %18 : i1 to i32
    %c0_i32_14 = arith.constant 0 : i32
    %20 = arith.cmpi ne, %19, %c0_i32_14 : i32
    scf.if %20 {
      %c0_15 = arith.constant 0 : index
      %c0_16 = arith.constant 0 : index
      %21 = vector.load %arg5[%c0_15, %c0_16] : memref<8x1xf32, #tpu.memory_space<vmem>>, vector<8x1xf32>
      %c0_17 = arith.constant 0 : index
      %c0_18 = arith.constant 0 : index
      %22 = vector.load %arg6[%c0_17, %c0_18] : memref<8x1xf32, #tpu.memory_space<vmem>>, vector<8x1xf32>
      %23 = arith.divf %21, %22 : vector<8x1xf32>
      %24 = math.sqrt %23 : vector<8x1xf32>
      %c0_19 = arith.constant 0 : index
      %c0_20 = arith.constant 0 : index
      %25 = vector.load %arg4[%c0_19, %c0_20] : memref<8x1xf32, #tpu.memory_space<vmem>>, vector<8x1xf32>
      tpu.vector_store %arg4[%c0_19, %c0_20], %24 {strides = array<i32>} : memref<8x1xf32, #tpu.memory_space<vmem>>, vector<8x1xf32>,
    } else {
    }
    return
  }
  func.func @transform_0(%arg0: i32, %arg1: i32) -> (i32, i32) {
    %c0_i32 = arith.constant 0 : i32
    return %arg0, %arg1 : i32, i32
  }
  func.func @transform_1(%arg0: i32, %arg1: i32) -> (i32, i32) {
    %c0_i32 = arith.constant 0 : i32
    return %arg0, %arg1 : i32, i32
  }
  func.func @transform_2(%arg0: i32, %arg1: i32) -> (i32, i32) {
    %c0_i32 = arith.constant 0 : i32
    %c0_i32_0 = arith.constant 0 : i32
    return %arg0, %c0_i32 : i32, i32
  }
}

</mosaic_0001>

<llo_original>
// kernel: tpu_custom_call.1
$region0: #{tpu_custom_call.1}
  #allocation0 [shape = 'u32[]', space=smem, size = 0x4, offset = 0x4, fixed_abs, tag = 'smem constant byte address 0x4 - core index']
  #allocation1 [shape = 'u32[144,128]{1,0:T(1,128)}', space=vmem, size = 0x12000, scoped, tag = 'internal scratch']
  #allocation2 [shape = 'f32[8,1]{1,0:T(8,128)}', space=vmem, size = 0x1000, scoped, tag = 'scratch operand']
  #allocation3 [shape = 'f32[8,1]{1,0:T(8,128)}', space=vmem, size = 0x1000, scoped, tag = 'scratch operand']
  %s0 = inlined_call_operand.hbm [shape: f32[8,256], index: 0, kind: input, shape index: {}]
  %s1 = inlined_call_operand.hbm [shape: f32[8,256], index: 1, kind: input, shape index: {}]
  %s2 = inlined_call_operand.vmem [shape: f32[8,1], index: 2, kind: output, shape index: {}]
  %s3 = sld [smem:[#allocation0]]
  $region34: #{tpu_custom_call.1} parent=0
    _
  %s5 = ssub.s32 1, %s3
  %s6 = scalar_select 0, %s5, %s3
  $region1: #{tpu_custom_call.1} parent=0
    #allocation4 [shape = 'u8[8192]{0}', space=vmem, size = 0x2000, scoped, tag = 'input window, operand 0, single buffered']
    #allocation5 [shape = 's32[1]{0}', space=sflag, size = 0x4, scoped, tag = 'scoped memory for tpu_custom_call.1']
    #allocation6 [shape = 'u8[8192]{0}', space=vmem, size = 0x2000, scoped, tag = 'input window, operand 1, single buffered']
    #allocation7 [shape = 's32[1]{0}', space=sflag, size = 0x4, scoped, tag = 'scoped memory for tpu_custom_call.1']
    %7 = vsyncpa [#allocation5], 0
    %8 = vsyncpa [#allocation7], 0
    // Predicated region
    $region2: #{tpu_custom_call.1} parent=1 // pred_check
      _
    $region3: #{tpu_custom_call.1} parent=1 // pred_check_branch
      %10 = sbr.rel (0) target = $region5
    $region4: #{tpu_custom_call.1} parent=1 // pred_region
      %s12 = ssub.s32 256, 256
      %13 = vsyncadd [#allocation5], %s12
      %s15 = sshll.u32 [#allocation4], 4
      %s16 = int_to_ptr.vmem [resolvable:$true] %s15
      %18 = dma.hbm_to_vmem [thread:$0]  %s0, 256, %s16, [#allocation5]
    $region5: #{tpu_custom_call.1} parent=1 // pred_fallthru
      _
    // Predicated region
    $region6: #{tpu_custom_call.1} parent=1 // pred_check
      _
    $region7: #{tpu_custom_call.1} parent=1 // pred_check_branch
      %20 = sbr.rel (0) target = $region9
    $region8: #{tpu_custom_call.1} parent=1 // pred_region
      %s22 = ssub.s32 256, 256
      %23 = vsyncadd [#allocation7], %s22
      %s25 = sshll.u32 [#allocation6], 4
      %s26 = int_to_ptr.vmem [resolvable:$true] %s25
      %28 = dma.hbm_to_vmem [thread:$0]  %s1, 256, %s26, [#allocation7]
    $region9: #{tpu_custom_call.1} parent=1 // pred_fallthru
      _
    // Predicated region
    $region10: #{tpu_custom_call.1} parent=1 // pred_check
      _
    $region11: #{tpu_custom_call.1} parent=1 // pred_check_branch
      %30 = sbr.rel (0) target = $region13
    $region12: #{tpu_custom_call.1} parent=1 // pred_region
      %31 = dma.done [#allocation5], 256
    $region13: #{tpu_custom_call.1} parent=1 // pred_fallthru
      _
    // Predicated region
    $region14: #{tpu_custom_call.1} parent=1 // pred_check
      _
    $region15: #{tpu_custom_call.1} parent=1 // pred_check_branch
      %33 = sbr.rel (0) target = $region17
    $region16: #{tpu_custom_call.1} parent=1 // pred_region
      %34 = dma.done [#allocation7], 256
    $region17: #{tpu_custom_call.1} parent=1 // pred_fallthru
      _
    %p35 = scmp.eq.s32.totalorder 0, 0
    // Predicated region
    $region18: #{tpu_custom_call.1} parent=1 // pred_check
      %p36 = pneg %p35
    $region19: #{tpu_custom_call.1} parent=1 // pred_check_branch
      %38 = sbr.rel (%p36) target = $region21
    $region20: #{tpu_custom_call.1} parent=1 // pred_region
      %vm39 = vcmask 7168
      %40 = vst.msk [vmem:[#allocation2] sm:$0xff] %vm39, 0.0
      %41 = vst.msk [vmem:[#allocation3] sm:$0xff] %vm39, 0.0
    $region21: #{tpu_custom_call.1} parent=1 // pred_fallthru
      _
    %v42 = vld [vmem:[#allocation4] sm:$0xff]
    %v43 = vld [vmem:[#allocation4 + $0x8] sm:$0xff]
    %v44 = vld [vmem:[#allocation6] sm:$0xff]
    %v45 = vld [vmem:[#allocation6 + $0x8] sm:$0xff]
    %v46 = vsub.f32 %v42, %v44
    %v47 = vsub.f32 %v43, %v45
    %v48 = vld [vmem:[#allocation2] sm:$0xff]
    %v49 = vmul.f32 %v46, %v46
    %v50 = vmul.f32 %v47, %v47
    %v51 = vadd.f32 %v49, %v50
    %52 = vadd.xlane.f32.xlu0 %v51
    %v53 = vpop.xlane.xlu0 %52
    %v54 = vadd.f32 %v48, %v53
    %vm55 = vcmask 7168
    %56 = vst.msk [vmem:[#allocation2] sm:$0xff] %vm55, %v54
    %v57 = vld [vmem:[#allocation3] sm:$0xff]
    %v58 = vmul.f32 %v44, %v44
    %v59 = vmul.f32 %v45, %v45
    %v60 = vadd.f32 %v58, %v59
    %61 = vadd.xlane.f32.xlu0 %v60
    %v62 = vpop.xlane.xlu0 %61
    %v63 = vadd.f32 %v57, %v62
    %64 = vst.msk [vmem:[#allocation3] sm:$0xff] %vm55, %v63
    // Predicated region
    $region22: #{tpu_custom_call.1} parent=1 // pred_check
      %p65 = pneg %p35
    $region23: #{tpu_custom_call.1} parent=1 // pred_check_branch
      %67 = sbr.rel (%p65) target = $region25
    $region24: #{tpu_custom_call.1} parent=1 // pred_region
      %v68 = vld [vmem:[#allocation2] sm:$0xff]
      %v69 = vld [vmem:[#allocation3] sm:$0xff]
      %v70 = vrcp.pop %v69
      %v71 = vmul.f32 %v68, %v70
      %v72 = vrsqrt.pop %v71
      %v73 = vmul.f32 %v71, %v72
      %vm74 = vcmp.eq.f32.partialorder %v71, inf
      %v75 = vsel %vm74, %v71, %v73
      %vm76 = vcmp.eq.f32.partialorder %v71, 0.0
      %v77 = vand.u32 %v71, 2147483648
      %v78 = vsel %vm76, %v77, %v75
      %79 = vst.msk [vmem:[%s2] sm:$0xff] %vm55, %v78
    $region25: #{tpu_custom_call.1} parent=1 // pred_fallthru
      _
    // Predicated region
    $region26: #{tpu_custom_call.1} parent=1 // pred_check
      _
    $region27: #{tpu_custom_call.1} parent=1 // pred_check_branch
      %81 = sbr.rel (0) target = $region29
    $region28: #{tpu_custom_call.1} parent=1 // pred_region
      _
    $region29: #{tpu_custom_call.1} parent=1 // pred_fallthru
      _
    // Predicated region
    $region30: #{tpu_custom_call.1} parent=1 // pred_check
      _
    $region31: #{tpu_custom_call.1} parent=1 // pred_check_branch
      %83 = sbr.rel (0) target = $region33
    $region32: #{tpu_custom_call.1} parent=1 // pred_region
      _
    $region33: #{tpu_custom_call.1} parent=1 // pred_fallthru
      _
    %84 = vsyncpa [#allocation5], 1
    %85 = vsyncpa [#allocation7], 1

</llo_original>
